<compile_context>
chip_gen: v7x
topology: tpu7x:2x2x1
jax: 0.10.0
libtpu: 0.0.40
codegen_flags: <defaults>
</compile_context>

<pallas_src>
import jax
import jax.numpy as jnp
from jax import lax
from jax.experimental import pallas as pl
from jax.experimental.pallas import tpu as pltpu


def _round_up(v, m):
    return ((v + m - 1) // m) * m


def gcn_kernel(edge_ref, x_ref, dinv_ref, wt_ref, out_ref, acc_ref):
    # edge_ref : [tE, 2] int32   column 0 = src id, column 1 = dst id, -1 = pad
    # x_ref    : [Np, Hp] bf16   dinv[src]-prescaled, zero-padded node features
    # dinv_ref : [tN, 1]  f32    deg^-1/2 for this row block's dst nodes
    # wt_ref   : [Hp, Hp] bf16   zero-padded W.T (so out = h @ wt)
    # out_ref  : [tN, Hp] f32
    # acc_ref  : [tN, Hp] f32    feature accumulator (resident across edge tiles)
    r = pl.program_id(0)            # dst-node row block   ("parallel")
    k = pl.program_id(1)            # edge tile            ("arbitrary" reduction)

    @pl.when(k == 0)
    def _():
        acc_ref[...] = jnp.zeros_like(acc_ref)

    tE = edge_ref.shape[0]
    Np = x_ref.shape[0]
    tN = acc_ref.shape[0]

    src = edge_ref[:, 0:1]                                           # [tE, 1]
    dst = edge_ref[:, 1:2]                                           # [tE, 1]

    # One-hot gather matrix over all source nodes (pad edges -> all-zero rows).
    node_iota = lax.broadcasted_iota(jnp.int32, (tE, Np), 1)
    src_oh = (src == node_iota).astype(jnp.bfloat16)                 # [tE, Np]

    # One-hot scatter matrix restricted to this row block's dst id range.
    row_iota = lax.broadcasted_iota(jnp.int32, (tE, tN), 1) + r * tN
    dst_oh = (dst == row_iota).astype(jnp.bfloat16)                  # [tE, tN]

    # xg[e, :] = dinv[src_e] * x[src_e, :]  (exact bf16 row select via MXU)
    xg = jnp.dot(src_oh, x_ref[...], preferred_element_type=jnp.float32)
    xg = xg.astype(jnp.bfloat16)                                     # lossless

    # acc[i, :] += sum_{e in tile : dst_e == i} xg[e, :]
    # Transposed-LHS contraction over the edge dim (no [tN, tE] copy).
    acc_ref[...] += lax.dot_general(
        dst_oh, xg,
        dimension_numbers=(((0,), (0,)), ((), ())),
        preferred_element_type=jnp.float32)

    @pl.when(k == pl.num_programs(1) - 1)
    def _():
        agg = dinv_ref[...] * acc_ref[...]                           # row scale dinv[dst]
        h = jnp.maximum(agg, 0.0).astype(jnp.bfloat16)               # ReLU
        out_ref[...] = jnp.dot(
            h, wt_ref[...], preferred_element_type=jnp.float32
        ).astype(out_ref.dtype)                                      # Linear (no bias)


def gcn_forward(x, edge_index, W, *, e_tile=1024, node_tile=None):
    """x: [N, H] f32, edge_index: [2, E] int (row0=src j, row1=dst i), W: [H, H]."""
    N, H = x.shape
    E = edge_index.shape[1]

    Hp = _round_up(H, 128)                              # lane-dense feature dim
    # dst-node row blocks: default one block; set node_tile for v7x megacore.
    tN = _round_up(node_tile, 128) if node_tile is not None else _round_up(N, 128)
    Np = _round_up(N, tN)                               # lane-dense node dim
    n_row_blocks = Np // tN

    e_tile = _round_up(e_tile, 16)
    tE = min(e_tile, _round_up(E, 16))                  # bf16 sublane multiple
    Ep = _round_up(E, tE)
    n_edge_steps = Ep // tE

    src_ids = edge_index[0].astype(jnp.int32)
    dst_ids = edge_index[1].astype(jnp.int32)

    # Degree / normalization computed once here (hoisted out of the hot loop).
    deg = jnp.zeros((N,), jnp.float32).at[dst_ids].add(1.0)
    dinv = jnp.where(deg > 0, lax.rsqrt(deg), 0.0)      # deg==0: no in-edges
    # TODO(synk): PyTorch's deg**-0.5 yields inf for isolated source nodes; we
    # mask to 0, which only differs where the reference itself produces inf/nan.

    x_scaled = x.astype(jnp.float32) * dinv[:, None]    # fold dinv[src] into x
    xp = jnp.pad(x_scaled, ((0, Np - N), (0, Hp - H))).astype(jnp.bfloat16)
    dinv_col = jnp.pad(dinv, (0, Np - N)).reshape(Np, 1)
    wtp = jnp.pad(W.T.astype(jnp.float32),
                  ((0, Hp - H), (0, Hp - H))).astype(jnp.bfloat16)

    # Pack src/dst ids into one [Ep, 2] block; -1 sentinel never matches a node.
    edges = jnp.stack([src_ids, dst_ids], axis=1)
    edges = jnp.pad(edges, ((0, Ep - E), (0, 0)), constant_values=-1)

    # Explicit scoped-VMEM budget (resident blocks + double buffers + temps).
    est = (2 * Np * Hp * 2          # x (double-buffered, bf16)
           + 2 * Hp * Hp * 2        # W.T
           + 2 * tN * Hp * 4        # out
           + 2 * tE * 128 * 4       # edge ids (lane-padded)
           + 2 * tN * 128 * 4       # dinv (lane-padded)
           + tN * Hp * 4            # accumulator scratch
           + 2 * tE * Np * 2        # src one-hot (+ bool temp)
           + 2 * tE * tN * 2        # dst one-hot (+ bool temp)
           + tE * Hp * 6            # xg f32 + bf16
           + 3 * tN * Hp * 4)       # epilogue temporaries
    vmem_limit = min(max(int(1.5 * est), 32 * 1024 * 1024), 64 * 1024 * 1024)

    out = pl.pallas_call(
        gcn_kernel,
        out_shape=jax.ShapeDtypeStruct((Np, Hp), jnp.float32),
        grid_spec=pltpu.PrefetchScalarGridSpec(
            num_scalar_prefetch=0,
            grid=(n_row_blocks, n_edge_steps),
            in_specs=[
                pl.BlockSpec((tE, 2), lambda r, k: (k, 0)),    # packed edge ids
                pl.BlockSpec((Np, Hp), lambda r, k: (0, 0)),   # x (resident)
                pl.BlockSpec((tN, 1), lambda r, k: (r, 0)),    # dinv row block
                pl.BlockSpec((Hp, Hp), lambda r, k: (0, 0)),   # W.T (resident)
            ],
            out_specs=pl.BlockSpec((tN, Hp), lambda r, k: (r, 0)),
            scratch_shapes=[pltpu.VMEM((tN, Hp), jnp.float32)],
        ),
        compiler_params=pltpu.CompilerParams(
            dimension_semantics=("parallel", "arbitrary"),     # E axis = reduction
            vmem_limit_bytes=vmem_limit,
        ),
    )(edges, xp, dinv_col, wtp)

    return out[:N, :H].astype(x.dtype)


def gcn_reference(x, edge_index, W):
    """Pure-JAX reference matching the PyTorch forward."""
    src = edge_index[0]
    dst = edge_index[1]
    N = x.shape[0]
    deg = jnp.zeros((N,), x.dtype).at[dst].add(jnp.ones_like(dst, x.dtype))
    dinv = deg ** -0.5
    norm = dinv[src] * dinv[dst]
    agg = jnp.zeros_like(x).at[dst].add(norm[:, None] * x[src])
    h = jnp.maximum(agg, 0.0)
    return h @ W.T


if __name__ == "__main__":
    N = 16        # number of nodes
    H = 32        # hidden size
    E_RAND = 32   # random edges (+ N self-loops so every node has degree >= 1)

    key = jax.random.PRNGKey(0)
    k_src, k_dst, k_x, k_w = jax.random.split(key, 4)

    src_r = jax.random.randint(k_src, (E_RAND,), 0, N, dtype=jnp.int32)
    dst_r = jax.random.randint(k_dst, (E_RAND,), 0, N, dtype=jnp.int32)
    loops = jnp.arange(N, dtype=jnp.int32)
    edge_index = jnp.stack([
        jnp.concatenate([src_r, loops]),   # edge_index_j (sources)
        jnp.concatenate([dst_r, loops]),   # edge_index_i (targets)
    ], axis=0)                             # [2, E]

    x = jax.random.normal(k_x, (N, H), dtype=jnp.float32)
    # nn.Linear(hidden, hidden, bias=False) weight: [H, H]
    W = jax.random.normal(k_w, (H, H), dtype=jnp.float32) * (1.0 / jnp.sqrt(H))

    out = gcn_forward(x, edge_index, W)
    out = jax.block_until_ready(out)

    ref = jax.block_until_ready(gcn_reference(x, edge_index, W))
    assert out.shape == (N, H) and out.dtype == jnp.float32
    assert jnp.allclose(out, ref, rtol=5e-2, atol=5e-2), "mismatch vs reference"

    print("KERNEL_OK")
</pallas_src>

<mosaic_0001>
module attributes {stable_mosaic.version = 11 : i64} {
  func.func @gcn_kernel(%arg0: i32, %arg1: i32, %arg2: memref<48x2xi32, #tpu.memory_space<vmem>>, %arg3: memref<128x128xbf16, #tpu.memory_space<vmem>>, %arg4: memref<128x1xf32, #tpu.memory_space<vmem>>, %arg5: memref<128x128xbf16, #tpu.memory_space<vmem>>, %arg6: memref<128x128xf32, #tpu.memory_space<vmem>>, %arg7: memref<128x128xf32, #tpu.memory_space<vmem>>) attributes {dimension_semantics = [#tpu.dimension_semantics<parallel>, #tpu.dimension_semantics<arbitrary>], iteration_bounds = array<i64: 1, 1>, scalar_prefetch = 0 : i64, scratch_operands = 1 : i64, tpu.core_type = #tpu.core_type<tc>, window_params = [{transform_indices = @transform_0, window_bounds = array<i64: 48, 2>}, {pipeline_mode = #tpu.pipeline_mode<synchronous>, transform_indices = @transform_1, window_bounds = array<i64: 128, 128>}, {transform_indices = @transform_2, window_bounds = array<i64: 128, 1>}, {pipeline_mode = #tpu.pipeline_mode<synchronous>, transform_indices = @transform_3, window_bounds = array<i64: 128, 128>}, {transform_indices = @transform_4, window_bounds = array<i64: 128, 128>}]} {
    %c0_i32 = arith.constant 0 : i32
    %0 = arith.cmpi eq, %arg1, %c0_i32 : i32
    %1 = arith.extui %0 : i1 to i32
    %c0_i32_0 = arith.constant 0 : i32
    %2 = arith.cmpi ne, %1, %c0_i32_0 : i32
    scf.if %2 {
      %cst_12 = arith.constant 0.000000e+00 : f32
      %30 = vector.broadcast %cst_12 : f32 to vector<128x128xf32>
      %c0_13 = arith.constant 0 : index
      %c0_14 = arith.constant 0 : index
      %31 = vector.load %arg7[%c0_13, %c0_14] : memref<128x128xf32, #tpu.memory_space<vmem>>, vector<128x128xf32>
      tpu.vector_store %arg7[%c0_13, %c0_14], %30 {strides = array<i32>} : memref<128x128xf32, #tpu.memory_space<vmem>>, vector<128x128xf32>,
    } else {
    }
    %c0 = arith.constant 0 : index
    %c0_1 = arith.constant 0 : index
    %3 = vector.load %arg2[%c0, %c0_1] : memref<48x2xi32, #tpu.memory_space<vmem>>, vector<48x1xi32>
    %c0_2 = arith.constant 0 : index
    %c1 = arith.constant 1 : index
    %4 = vector.load %arg2[%c0_2, %c1] : memref<48x2xi32, #tpu.memory_space<vmem>>, vector<48x1xi32>
    %5 = tpu.iota {dimensions = array<i32: 1>} : vector<48x128xi32>
    %6 = vector.broadcast %3 : vector<48x1xi32> to vector<48x128xi32>
    %7 = arith.cmpi eq, %6, %5 : vector<48x128xi32>
    %8 = arith.extui %7 : vector<48x128xi1> to vector<48x128xi32>
    %9 = arith.sitofp %8 : vector<48x128xi32> to vector<48x128xf32>
    %10 = arith.truncf %9 : vector<48x128xf32> to vector<48x128xbf16>
    %11 = tpu.iota {dimensions = array<i32: 1>} : vector<48x128xi32>
    %c128_i32 = arith.constant 128 : i32
    %12 = arith.muli %arg0, %c128_i32 : i32
    %13 = vector.broadcast %12 : i32 to vector<48x128xi32>
    %14 = arith.addi %11, %13 : vector<48x128xi32>
    %15 = vector.broadcast %4 : vector<48x1xi32> to vector<48x128xi32>
    %16 = arith.cmpi eq, %15, %14 : vector<48x128xi32>
    %17 = arith.extui %16 : vector<48x128xi1> to vector<48x128xi32>
    %18 = arith.sitofp %17 : vector<48x128xi32> to vector<48x128xf32>
    %19 = arith.truncf %18 : vector<48x128xf32> to vector<48x128xbf16>
    %c0_3 = arith.constant 0 : index
    %c0_4 = arith.constant 0 : index
    %20 = vector.load %arg3[%c0_3, %c0_4] : memref<128x128xbf16, #tpu.memory_space<vmem>>, vector<128x128xbf16>
    %cst = arith.constant dense<0.000000e+00> : vector<48x128xf32>
    %21 = tpu.matmul %10, %20, %cst {dimension_numbers = #tpu.dot_dimension_numbers<[1], [0], [0], [1], [0, 0, 1, 1], [], []>} : vector<48x128xbf16>, vector<128x128xbf16>, vector<48x128xf32> -> vector<48x128xf32>
    %22 = arith.truncf %21 : vector<48x128xf32> to vector<48x128xbf16>
    %c0_5 = arith.constant 0 : index
    %c0_6 = arith.constant 0 : index
    %23 = vector.load %arg7[%c0_5, %c0_6] : memref<128x128xf32, #tpu.memory_space<vmem>>, vector<128x128xf32>
    %cst_7 = arith.constant dense<0.000000e+00> : vector<128x128xf32>
    %24 = tpu.matmul %19, %22, %cst_7 {dimension_numbers = #tpu.dot_dimension_numbers<[0], [0], [1], [1], [0, 1, 1, 1], [], []>} : vector<48x128xbf16>, vector<48x128xbf16>, vector<128x128xf32> -> vector<128x128xf32>
    %25 = arith.addf %23, %24 : vector<128x128xf32>
    %c0_8 = arith.constant 0 : index
    %c0_9 = arith.constant 0 : index
    %26 = vector.load %arg7[%c0_8, %c0_9] : memref<128x128xf32, #tpu.memory_space<vmem>>, vector<128x128xf32>
    tpu.vector_store %arg7[%c0_8, %c0_9], %25 {strides = array<i32>} : memref<128x128xf32, #tpu.memory_space<vmem>>, vector<128x128xf32>,
    %c0_i32_10 = arith.constant 0 : i32
    %27 = arith.cmpi eq, %arg1, %c0_i32_10 : i32
    %28 = arith.extui %27 : i1 to i32
    %c0_i32_11 = arith.constant 0 : i32
    %29 = arith.cmpi ne, %28, %c0_i32_11 : i32
    scf.if %29 {
      %c0_12 = arith.constant 0 : index
      %c0_13 = arith.constant 0 : index
      %30 = vector.load %arg4[%c0_12, %c0_13] : memref<128x1xf32, #tpu.memory_space<vmem>>, vector<128x1xf32>
      %c0_14 = arith.constant 0 : index
      %c0_15 = arith.constant 0 : index
      %31 = vector.load %arg7[%c0_14, %c0_15] : memref<128x128xf32, #tpu.memory_space<vmem>>, vector<128x128xf32>
      %32 = vector.broadcast %30 : vector<128x1xf32> to vector<128x128xf32>
      %33 = arith.mulf %32, %31 : vector<128x128xf32>
      %cst_16 = arith.constant 0.000000e+00 : f32
      %34 = vector.broadcast %cst_16 : f32 to vector<128x128xf32>
      %35 = arith.maximumf %33, %34 : vector<128x128xf32>
      %36 = arith.truncf %35 : vector<128x128xf32> to vector<128x128xbf16>
      %c0_17 = arith.constant 0 : index
      %c0_18 = arith.constant 0 : index
      %37 = vector.load %arg5[%c0_17, %c0_18] : memref<128x128xbf16, #tpu.memory_space<vmem>>, vector<128x128xbf16>
      %cst_19 = arith.constant dense<0.000000e+00> : vector<128x128xf32>
      %38 = tpu.matmul %36, %37, %cst_19 {dimension_numbers = #tpu.dot_dimension_numbers<[1], [0], [0], [1], [0, 0, 1, 1], [], []>} : vector<128x128xbf16>, vector<128x128xbf16>, vector<128x128xf32> -> vector<128x128xf32>
      %c0_20 = arith.constant 0 : index
      %c0_21 = arith.constant 0 : index
      %39 = vector.load %arg6[%c0_20, %c0_21] : memref<128x128xf32, #tpu.memory_space<vmem>>, vector<128x128xf32>
      tpu.vector_store %arg6[%c0_20, %c0_21], %38 {strides = array<i32>} : memref<128x128xf32, #tpu.memory_space<vmem>>, vector<128x128xf32>,
    } else {
    }
    return
  }
  func.func @transform_0(%arg0: i32, %arg1: i32) -> (i32, i32) {
    %c0_i32 = arith.constant 0 : i32
    %c0_i32_0 = arith.constant 0 : i32
    return %arg1, %c0_i32 : i32, i32
  }
  func.func @transform_1(%arg0: i32, %arg1: i32) -> (i32, i32) {
    %c0_i32 = arith.constant 0 : i32
    %c0_i32_0 = arith.constant 0 : i32
    %c0_i32_1 = arith.constant 0 : i32
    return %c0_i32, %c0_i32_0 : i32, i32
  }
  func.func @transform_2(%arg0: i32, %arg1: i32) -> (i32, i32) {
    %c0_i32 = arith.constant 0 : i32
    %c0_i32_0 = arith.constant 0 : i32
    return %arg0, %c0_i32 : i32, i32
  }
  func.func @transform_3(%arg0: i32, %arg1: i32) -> (i32, i32) {
    %c0_i32 = arith.constant 0 : i32
    %c0_i32_0 = arith.constant 0 : i32
    %c0_i32_1 = arith.constant 0 : i32
    return %c0_i32, %c0_i32_0 : i32, i32
  }
  func.func @transform_4(%arg0: i32, %arg1: i32) -> (i32, i32) {
    %c0_i32 = arith.constant 0 : i32
    %c0_i32_0 = arith.constant 0 : i32
    return %arg0, %c0_i32 : i32, i32
  }
}

</mosaic_0001>

<llo_original>
// kernel: tpu_custom_call.1
$region0: #{tpu_custom_call.1}
  #allocation0 [shape = 'u32[]', space=smem, size = 0x4, offset = 0x4, fixed_abs, tag = 'smem constant byte address 0x4 - core index']
  #allocation1 [shape = 'u32[144,128]{1,0:T(1,128)}', space=vmem, size = 0x12000, scoped, tag = 'internal scratch']
  #allocation2 [shape = 'f32[128,128]{1,0:T(8,128)}', space=vmem, size = 0x10000, scoped, tag = 'scratch operand']
  %s0 = inlined_call_operand.vmem [shape: s32[48,2], index: 0, kind: input, shape index: {}]
  %s1 = inlined_call_operand.vmem [shape: bf16[128,128], index: 1, kind: input, shape index: {}]
  %s2 = inlined_call_operand.vmem [shape: f32[128,1], index: 2, kind: input, shape index: {}]
  %s3 = inlined_call_operand.vmem [shape: bf16[128,128], index: 3, kind: input, shape index: {}]
  %s4 = inlined_call_operand.hbm [shape: f32[128,128], index: 4, kind: output, shape index: {}]
  %s5 = sld [smem:[#allocation0]]
  $region34: #{tpu_custom_call.1} parent=0
    _
  %s7 = ssub.s32 1, %s5
  %s8 = scalar_select 0, %s7, %s5
  $region1: #{tpu_custom_call.1} parent=0
    #allocation3 [shape = 'u8[65536]{0}', space=vmem, size = 0x10000, scoped, tag = 'output window, operand 0, single buffered']
    #allocation4 [shape = 's32[1]{0}', space=sflag, size = 0x4, scoped, tag = 'scoped memory for tpu_custom_call.1']
    %9 = vsyncpa [#allocation4], 0
    // Predicated region
    $region2: #{tpu_custom_call.1} parent=1 // pred_check
      _
    $region3: #{tpu_custom_call.1} parent=1 // pred_check_branch
      %11 = sbr.rel (0) target = $region5
    $region4: #{tpu_custom_call.1} parent=1 // pred_region
      _
    $region5: #{tpu_custom_call.1} parent=1 // pred_fallthru
      _
    // Predicated region
    $region6: #{tpu_custom_call.1} parent=1 // pred_check
      _
    $region7: #{tpu_custom_call.1} parent=1 // pred_check_branch
      %13 = sbr.rel (0) target = $region9
    $region8: #{tpu_custom_call.1} parent=1 // pred_region
      _
    $region9: #{tpu_custom_call.1} parent=1 // pred_fallthru
      _
    // Predicated region
    $region10: #{tpu_custom_call.1} parent=1 // pred_check
      _
    $region11: #{tpu_custom_call.1} parent=1 // pred_check_branch
      %15 = sbr.rel (0) target = $region13
    $region12: #{tpu_custom_call.1} parent=1 // pred_region
      _
    $region13: #{tpu_custom_call.1} parent=1 // pred_fallthru
      _
    // Predicated region
    $region14: #{tpu_custom_call.1} parent=1 // pred_check
      _
    $region15: #{tpu_custom_call.1} parent=1 // pred_check_branch
      %17 = sbr.rel (0) target = $region17
    $region16: #{tpu_custom_call.1} parent=1 // pred_region
      _
    $region17: #{tpu_custom_call.1} parent=1 // pred_fallthru
      _
    %p19 = scmp.eq.s32.totalorder 0, 0
    // Predicated region
    $region18: #{tpu_custom_call.1} parent=1 // pred_check
      %p20 = pneg %p19
    $region19: #{tpu_custom_call.1} parent=1 // pred_check_branch
      %22 = sbr.rel (%p20) target = $region21
    $region20: #{tpu_custom_call.1} parent=1 // pred_region
      %23 = vst [vmem:[#allocation2] sm:$0xff] 0.0
      %24 = vst [vmem:[#allocation2 + $0x8] sm:$0xff] 0.0
      %25 = vst [vmem:[#allocation2 + $0x10] sm:$0xff] 0.0
      %26 = vst [vmem:[#allocation2 + $0x18] sm:$0xff] 0.0
      %27 = vst [vmem:[#allocation2 + $0x20] sm:$0xff] 0.0
      %28 = vst [vmem:[#allocation2 + $0x28] sm:$0xff] 0.0
      %29 = vst [vmem:[#allocation2 + $0x30] sm:$0xff] 0.0
      %30 = vst [vmem:[#allocation2 + $0x38] sm:$0xff] 0.0
      %31 = vst [vmem:[#allocation2 + $0x40] sm:$0xff] 0.0
      %32 = vst [vmem:[#allocation2 + $0x48] sm:$0xff] 0.0
      %33 = vst [vmem:[#allocation2 + $0x50] sm:$0xff] 0.0
      %34 = vst [vmem:[#allocation2 + $0x58] sm:$0xff] 0.0
      %35 = vst [vmem:[#allocation2 + $0x60] sm:$0xff] 0.0
      %36 = vst [vmem:[#allocation2 + $0x68] sm:$0xff] 0.0
      %37 = vst [vmem:[#allocation2 + $0x70] sm:$0xff] 0.0
      %38 = vst [vmem:[#allocation2 + $0x78] sm:$0xff] 0.0
    $region21: #{tpu_custom_call.1} parent=1 // pred_fallthru
      _
    %v39 = vld [vmem:[%s0] sm:$0xff]
    %v40 = vld [vmem:[%s0 + $0x8] sm:$0xff]
    %v41 = vld [vmem:[%s0 + $0x10] sm:$0xff]
    %v42 = vld [vmem:[%s0 + $0x18] sm:$0xff]
    %v43 = vld [vmem:[%s0 + $0x20] sm:$0xff]
    %v44 = vld [vmem:[%s0 + $0x28] sm:$0xff]
    %v45 = vlaneseq
    %v46 = vand.u32 %v45, 127
    %47 = vset.pattern.permute.xlu0 0
    %48 = vperm.xlu0 %47, %v39
    %v49 = vpop.permute.xlu0 %48
    %50 = vset.pattern.permute.xlu0 0
    %51 = vperm.xlu0 %50, %v40
    %v52 = vpop.permute.xlu0 %51
    %53 = vset.pattern.permute.xlu0 0
    %54 = vperm.xlu0 %53, %v41
    %v55 = vpop.permute.xlu0 %54
    %56 = vset.pattern.permute.xlu0 0
    %57 = vperm.xlu0 %56, %v42
    %v58 = vpop.permute.xlu0 %57
    %59 = vset.pattern.permute.xlu0 0
    %60 = vperm.xlu0 %59, %v43
    %v61 = vpop.permute.xlu0 %60
    %62 = vset.pattern.permute.xlu0 0
    %63 = vperm.xlu0 %62, %v44
    %v64 = vpop.permute.xlu0 %63
    %vm65 = vcmp.eq.s32.totalorder %v49, %v46
    %vm66 = vcmp.eq.s32.totalorder %v52, %v46
    %vm67 = vcmp.eq.s32.totalorder %v55, %v46
    %vm68 = vcmp.eq.s32.totalorder %v58, %v46
    %vm69 = vcmp.eq.s32.totalorder %v61, %v46
    %vm70 = vcmp.eq.s32.totalorder %v64, %v46
    %v71 = vsel %vm65, 1, 0
    %v72 = vsel %vm66, 1, 0
    %v73 = vsel %vm67, 1, 0
    %v74 = vsel %vm68, 1, 0
    %v75 = vsel %vm69, 1, 0
    %v76 = vsel %vm70, 1, 0
    %v77 = vcvt.s32.f32 %v71
    %v78 = vcvt.s32.f32 %v72
    %v79 = vcvt.s32.f32 %v73
    %v80 = vcvt.s32.f32 %v74
    %v81 = vcvt.s32.f32 %v75
    %v82 = vcvt.s32.f32 %v76
    %v83 = vpack.c.bf16 %v78, %v77
    %v84 = vpack.c.bf16 %v80, %v79
    %v85 = vpack.c.bf16 %v82, %v81
    %s86 = smul.u32 0, 128
    %v87 = vstv %s86
    %v88 = vadd.s32 %v46, %v87
    %89 = vset.pattern.permute.xlu0 1
    %90 = vperm.xlu0 %89, %v39
    %v91 = vpop.permute.xlu0 %90
    %92 = vset.pattern.permute.xlu0 1
    %93 = vperm.xlu0 %92, %v40
    %v94 = vpop.permute.xlu0 %93
    %95 = vset.pattern.permute.xlu0 1
    %96 = vperm.xlu0 %95, %v41
    %v97 = vpop.permute.xlu0 %96
    %98 = vset.pattern.permute.xlu0 1
    %99 = vperm.xlu0 %98, %v42
    %v100 = vpop.permute.xlu0 %99
    %101 = vset.pattern.permute.xlu0 1
    %102 = vperm.xlu0 %101, %v43
    %v103 = vpop.permute.xlu0 %102
    %104 = vset.pattern.permute.xlu0 1
    %105 = vperm.xlu0 %104, %v44
    %v106 = vpop.permute.xlu0 %105
    %vm107 = vcmp.eq.s32.totalorder %v91, %v88
    %vm108 = vcmp.eq.s32.totalorder %v94, %v88
    %vm109 = vcmp.eq.s32.totalorder %v97, %v88
    %vm110 = vcmp.eq.s32.totalorder %v100, %v88
    %vm111 = vcmp.eq.s32.totalorder %v103, %v88
    %vm112 = vcmp.eq.s32.totalorder %v106, %v88
    %v113 = vsel %vm107, 1, 0
    %v114 = vsel %vm108, 1, 0
    %v115 = vsel %vm109, 1, 0
    %v116 = vsel %vm110, 1, 0
    %v117 = vsel %vm111, 1, 0
    %v118 = vsel %vm112, 1, 0
    %v119 = vcvt.s32.f32 %v113
    %v120 = vcvt.s32.f32 %v114
    %v121 = vcvt.s32.f32 %v115
    %v122 = vcvt.s32.f32 %v116
    %v123 = vcvt.s32.f32 %v117
    %v124 = vcvt.s32.f32 %v118
    %v125 = vpack.c.bf16 %v120, %v119
    %v126 = vpack.c.bf16 %v122, %v121
    %v127 = vpack.c.bf16 %v124, %v123
    %v128 = vld [vmem:[%s1] sm:$0xf]
    %v129 = vld [vmem:[%s1 + $0x4] sm:$0xf]
    %v130 = vld [vmem:[%s1 + $0x8] sm:$0xf]
    %v131 = vld [vmem:[%s1 + $0xc] sm:$0xf]
    %v132 = vld [vmem:[%s1 + $0x10] sm:$0xf]
    %v133 = vld [vmem:[%s1 + $0x14] sm:$0xf]
    %v134 = vld [vmem:[%s1 + $0x18] sm:$0xf]
    %v135 = vld [vmem:[%s1 + $0x1c] sm:$0xf]
    %v136 = vld [vmem:[%s1 + $0x20] sm:$0xf]
    %v137 = vld [vmem:[%s1 + $0x24] sm:$0xf]
    %v138 = vld [vmem:[%s1 + $0x28] sm:$0xf]
    %v139 = vld [vmem:[%s1 + $0x2c] sm:$0xf]
    %v140 = vld [vmem:[%s1 + $0x30] sm:$0xf]
    %v141 = vld [vmem:[%s1 + $0x34] sm:$0xf]
    %v142 = vld [vmem:[%s1 + $0x38] sm:$0xf]
    %v143 = vld [vmem:[%s1 + $0x3c] sm:$0xf]
    %v160 = vunpack.c.l.b16 %v128
    %v161 = vunpack.c.l.b16 %v129
    %v162 = vunpack.c.l.b16 %v130
    %v163 = vunpack.c.l.b16 %v131
    %v164 = vunpack.c.l.b16 %v132
    %v165 = vunpack.c.l.b16 %v133
    %v166 = vunpack.c.l.b16 %v134
    %v167 = vunpack.c.l.b16 %v135
    %v168 = vunpack.c.l.b16 %v136
    %v169 = vunpack.c.l.b16 %v137
    %v170 = vunpack.c.l.b16 %v138
    %v171 = vunpack.c.l.b16 %v139
    %v172 = vunpack.c.l.b16 %v140
    %v173 = vunpack.c.l.b16 %v141
    %v174 = vunpack.c.l.b16 %v142
    %v175 = vunpack.c.l.b16 %v143
    %v176 = vpack.c.b16 %v161, %v160
    %v177 = vpack.c.b16 %v163, %v162
    %v178 = vpack.c.b16 %v165, %v164
    %v179 = vpack.c.b16 %v167, %v166
    %v180 = vpack.c.b16 %v169, %v168
    %v181 = vpack.c.b16 %v171, %v170
    %v182 = vpack.c.b16 %v173, %v172
    %v183 = vpack.c.b16 %v175, %v174
    %192 = vmatprep.subr.bf16.mxu0 0
    %193 = vmatpush1.bf16.msra.mxu0 %v176
    %194 = vmatprep.subr.bf16.mxu0 0
    %195 = vmatpush1.bf16.msra.mxu0 %v177
    %196 = vmatprep.subr.bf16.mxu0 0
    %197 = vmatpush1.bf16.msra.mxu0 %v178
    %198 = vmatprep.subr.bf16.mxu0 0
    %199 = vmatpush1.bf16.msra.mxu0 %v179
    %200 = vmatprep.subr.bf16.mxu0 0
    %201 = vmatpush1.bf16.msra.mxu0 %v180
    %202 = vmatprep.subr.bf16.mxu0 0
    %203 = vmatpush1.bf16.msra.mxu0 %v181
    %204 = vmatprep.subr.bf16.mxu0 0
    %205 = vmatpush1.bf16.msra.mxu0 %v182
    %206 = vmatprep.subr.bf16.mxu0 0
    %207 = vmatpush1.bf16.msra.mxu0 %v183
    %208 = vmatprep.subr.bf16.mxu0 0
    %209 = vmatpush1.bf16.msra.mxu0 0
    %210 = vmatprep.subr.bf16.mxu0 0
    %211 = vmatpush1.bf16.msra.mxu0 0
    %212 = vmatprep.subr.bf16.mxu0 0
    %213 = vmatpush1.bf16.msra.mxu0 0
    %214 = vmatprep.subr.bf16.mxu0 0
    %215 = vmatpush1.bf16.msra.mxu0 0
    %216 = vmatprep.subr.bf16.mxu0 0
    %217 = vmatpush1.bf16.msra.mxu0 0
    %218 = vmatprep.subr.bf16.mxu0 0
    %219 = vmatpush1.bf16.msra.mxu0 0
    %220 = vmatprep.subr.bf16.mxu0 0
    %221 = vmatpush1.bf16.msra.mxu0 0
    %222 = vmatprep.subr.bf16.mxu0 0
    %223 = vmatpush1.bf16.msra.mxu0 0
    %224 = vmatprep.mubr.bf16.mxu0 0
    %225 = vmatmul.mubr.bf16.gmra.mrb[0].mxu0 %v83
    %v226 = vpop.f32.mrb[0].mxu0
    %v227 = vadd.f32 0.0, %v226
    %v228 = vpop.f32.mrb[0].mxu0
    %v229 = vpop.f32.mrb[0].mxu0
    %v230 = vadd.f32 0.0, %v229
    %v231 = vpop.f32.mrb[0].mxu0
    %232 = vmatprep.mubr.bf16.mxu0 0
    %233 = vmatmul.mubr.bf16.gmra.mrb[0].mxu0 %v84
    %v234 = vpop.f32.mrb[0].mxu0
    %v235 = vadd.f32 0.0, %v234
    %v236 = vpop.f32.mrb[0].mxu0
    %v237 = vpop.f32.mrb[0].mxu0
    %v238 = vadd.f32 0.0, %v237
    %v239 = vpop.f32.mrb[0].mxu0
    %240 = vmatprep.mubr.bf16.mxu0 0
    %241 = vmatmul.mubr.bf16.gmra.mrb[0].mxu0 %v85
    %v242 = vpop.f32.mrb[0].mxu0
    %v243 = vadd.f32 0.0, %v242
    %v244 = vpop.f32.mrb[0].mxu0
    %v245 = vpop.f32.mrb[0].mxu0
    %v246 = vadd.f32 0.0, %v245
    %v247 = vpop.f32.mrb[0].mxu0
    %248 = vdwg.mxu0
    %v249 = vpack.c.bf16 %v230, %v227
    %v250 = vpack.c.bf16 %v238, %v235
    %v251 = vpack.c.bf16 %v246, %v243
    %v252 = vld [vmem:[#allocation2] sm:$0xff]
    %v253 = vld [vmem:[#allocation2 + $0x8] sm:$0xff]
    %v254 = vld [vmem:[#allocation2 + $0x10] sm:$0xff]
    %v255 = vld [vmem:[#allocation2 + $0x18] sm:$0xff]
    %v256 = vld [vmem:[#allocation2 + $0x20] sm:$0xff]
    %v257 = vld [vmem:[#allocation2 + $0x28] sm:$0xff]
    %v258 = vld [vmem:[#allocation2 + $0x30] sm:$0xff]
    %v259 = vld [vmem:[#allocation2 + $0x38] sm:$0xff]
    %v260 = vld [vmem:[#allocation2 + $0x40] sm:$0xff]
    %v261 = vld [vmem:[#allocation2 + $0x48] sm:$0xff]
    %v262 = vld [vmem:[#allocation2 + $0x50] sm:$0xff]
    %v263 = vld [vmem:[#allocation2 + $0x58] sm:$0xff]
    %v264 = vld [vmem:[#allocation2 + $0x60] sm:$0xff]
    %v265 = vld [vmem:[#allocation2 + $0x68] sm:$0xff]
    %v266 = vld [vmem:[#allocation2 + $0x70] sm:$0xff]
    %v267 = vld [vmem:[#allocation2 + $0x78] sm:$0xff]
    %268 = vxpose.xlu0.c.b16.start [1/8] %v125, 128
    %269 = vxpose.xlu0.c.b16.cont [2/8] %v126, 128
    %270 = vxpose.xlu0.c.b16.cont [3/8] %v127, 128
    %271 = vxpose.xlu0.c.b16.cont [4/8] 0, 128
    %272 = vxpose.xlu0.c.b16.cont [5/8] 0, 128
    %273 = vxpose.xlu0.c.b16.cont [6/8] 0, 128
    %274 = vxpose.xlu0.c.b16.cont [7/8] 0, 128
    %275 = vxpose.xlu0.c.b16.end [8/8] 0, 128
    %v276 = vpop.trf.xlu0
    %v277 = vpop.trf.xlu0
    %v278 = vpop.trf.xlu0
    %v279 = vpop.trf.xlu0
    %v280 = vpop.trf.xlu0
    %v281 = vpop.trf.xlu0
    %v282 = vpop.trf.xlu0
    %v283 = vpop.trf.xlu0
    %vm284 = vcmask 392192
    %v286 = vsel %vm284, %v276, 0
    %v289 = vsel %vm284, %v277, 0
    %v292 = vsel %vm284, %v278, 0
    %v295 = vsel %vm284, %v279, 0
    %v298 = vsel %vm284, %v280, 0
    %v301 = vsel %vm284, %v281, 0
    %v304 = vsel %vm284, %v282, 0
    %v307 = vsel %vm284, %v283, 0
    %309 = vmatprep.subr.bf16.mxu0 0
    %310 = vmatpush1.bf16.msra.mxu0 %v249
    %311 = vmatprep.subr.bf16.mxu0 0
    %312 = vmatpush1.bf16.msra.mxu0 %v250
    %313 = vmatprep.subr.bf16.mxu0 0
    %314 = vmatpush1.bf16.msra.mxu0 %v251
    %315 = vmatprep.subr.bf16.mxu0 0
    %316 = vmatpush1.bf16.msra.mxu0 0
    %317 = vmatprep.subr.bf16.mxu0 0
    %318 = vmatpush1.bf16.msra.mxu0 0
    %319 = vmatprep.subr.bf16.mxu0 0
    %320 = vmatpush1.bf16.msra.mxu0 0
    %321 = vmatprep.subr.bf16.mxu0 0
    %322 = vmatpush1.bf16.msra.mxu0 0
    %323 = vmatprep.subr.bf16.mxu0 0
    %324 = vmatpush1.bf16.msra.mxu0 0
    %325 = vmatprep.subr.bf16.mxu0 0
    %326 = vmatpush1.bf16.msra.mxu0 0
    %327 = vmatprep.subr.bf16.mxu0 0
    %328 = vmatpush1.bf16.msra.mxu0 0
    %329 = vmatprep.subr.bf16.mxu0 0
    %330 = vmatpush1.bf16.msra.mxu0 0
    %331 = vmatprep.subr.bf16.mxu0 0
    %332 = vmatpush1.bf16.msra.mxu0 0
    %333 = vmatprep.subr.bf16.mxu0 0
    %334 = vmatpush1.bf16.msra.mxu0 0
    %335 = vmatprep.subr.bf16.mxu0 0
    %336 = vmatpush1.bf16.msra.mxu0 0
    %337 = vmatprep.subr.bf16.mxu0 0
    %338 = vmatpush1.bf16.msra.mxu0 0
    %339 = vmatprep.subr.bf16.mxu0 0
    %340 = vmatpush1.bf16.msra.mxu0 0
    %341 = vmatprep.mubr.bf16.mxu0 0
    %342 = vmatmul.mubr.bf16.gmra.mrb[0].mxu0 %v286
    %v343 = vpop.f32.mrb[0].mxu0
    %v344 = vadd.f32 0.0, %v343
    %v345 = vpop.f32.mrb[0].mxu0
    %v346 = vpop.f32.mrb[0].mxu0
    %v347 = vadd.f32 0.0, %v346
    %v348 = vpop.f32.mrb[0].mxu0
    %349 = vmatprep.mubr.bf16.mxu0 0
    %350 = vmatmul.mubr.bf16.gmra.mrb[0].mxu0 %v289
    %v351 = vpop.f32.mrb[0].mxu0
    %v352 = vadd.f32 0.0, %v351
    %v353 = vpop.f32.mrb[0].mxu0
    %v354 = vpop.f32.mrb[0].mxu0
    %v355 = vadd.f32 0.0, %v354
    %v356 = vpop.f32.mrb[0].mxu0
    %357 = vmatprep.mubr.bf16.mxu0 0
    %358 = vmatmul.mubr.bf16.gmra.mrb[0].mxu0 %v292
    %v359 = vpop.f32.mrb[0].mxu0
    %v360 = vadd.f32 0.0, %v359
    %v361 = vpop.f32.mrb[0].mxu0
    %v362 = vpop.f32.mrb[0].mxu0
    %v363 = vadd.f32 0.0, %v362
    %v364 = vpop.f32.mrb[0].mxu0
    %365 = vmatprep.mubr.bf16.mxu0 0
    %366 = vmatmul.mubr.bf16.gmra.mrb[0].mxu0 %v295
    %v367 = vpop.f32.mrb[0].mxu0
    %v368 = vadd.f32 0.0, %v367
    %v369 = vpop.f32.mrb[0].mxu0
    %v370 = vpop.f32.mrb[0].mxu0
    %v371 = vadd.f32 0.0, %v370
    %v372 = vpop.f32.mrb[0].mxu0
    %373 = vmatprep.mubr.bf16.mxu0 0
    %374 = vmatmul.mubr.bf16.gmra.mrb[0].mxu0 %v298
    %v375 = vpop.f32.mrb[0].mxu0
    %v376 = vadd.f32 0.0, %v375
    %v377 = vpop.f32.mrb[0].mxu0
    %v378 = vpop.f32.mrb[0].mxu0
    %v379 = vadd.f32 0.0, %v378
    %v380 = vpop.f32.mrb[0].mxu0
    %381 = vmatprep.mubr.bf16.mxu0 0
    %382 = vmatmul.mubr.bf16.gmra.mrb[0].mxu0 %v301
    %v383 = vpop.f32.mrb[0].mxu0
    %v384 = vadd.f32 0.0, %v383
    %v385 = vpop.f32.mrb[0].mxu0
    %v386 = vpop.f32.mrb[0].mxu0
    %v387 = vadd.f32 0.0, %v386
    %v388 = vpop.f32.mrb[0].mxu0
    %389 = vmatprep.mubr.bf16.mxu0 0
    %390 = vmatmul.mubr.bf16.gmra.mrb[0].mxu0 %v304
    %v391 = vpop.f32.mrb[0].mxu0
    %v392 = vadd.f32 0.0, %v391
    %v393 = vpop.f32.mrb[0].mxu0
    %v394 = vpop.f32.mrb[0].mxu0
    %v395 = vadd.f32 0.0, %v394
    %v396 = vpop.f32.mrb[0].mxu0
    %397 = vmatprep.mubr.bf16.mxu0 0
    %398 = vmatmul.mubr.bf16.gmra.mrb[0].mxu0 %v307
    %v399 = vpop.f32.mrb[0].mxu0
    %v400 = vadd.f32 0.0, %v399
    %v401 = vpop.f32.mrb[0].mxu0
    %v402 = vpop.f32.mrb[0].mxu0
    %v403 = vadd.f32 0.0, %v402
    %v404 = vpop.f32.mrb[0].mxu0
    %405 = vdwg.mxu0
    %v406 = vadd.f32 %v252, %v344
    %v407 = vadd.f32 %v253, %v347
    %v408 = vadd.f32 %v254, %v352
    %v409 = vadd.f32 %v255, %v355
    %v410 = vadd.f32 %v256, %v360
    %v411 = vadd.f32 %v257, %v363
    %v412 = vadd.f32 %v258, %v368
    %v413 = vadd.f32 %v259, %v371
    %v414 = vadd.f32 %v260, %v376
    %v415 = vadd.f32 %v261, %v379
    %v416 = vadd.f32 %v262, %v384
    %v417 = vadd.f32 %v263, %v387
    %v418 = vadd.f32 %v264, %v392
    %v419 = vadd.f32 %v265, %v395
    %v420 = vadd.f32 %v266, %v400
    %v421 = vadd.f32 %v267, %v403
    %422 = vst [vmem:[#allocation2] sm:$0xff] %v406
    %423 = vst [vmem:[#allocation2 + $0x8] sm:$0xff] %v407
    %424 = vst [vmem:[#allocation2 + $0x10] sm:$0xff] %v408
    %425 = vst [vmem:[#allocation2 + $0x18] sm:$0xff] %v409
    %426 = vst [vmem:[#allocation2 + $0x20] sm:$0xff] %v410
    %427 = vst [vmem:[#allocation2 + $0x28] sm:$0xff] %v411
    %428 = vst [vmem:[#allocation2 + $0x30] sm:$0xff] %v412
    %429 = vst [vmem:[#allocation2 + $0x38] sm:$0xff] %v413
    %430 = vst [vmem:[#allocation2 + $0x40] sm:$0xff] %v414
    %431 = vst [vmem:[#allocation2 + $0x48] sm:$0xff] %v415
    %432 = vst [vmem:[#allocation2 + $0x50] sm:$0xff] %v416
    %433 = vst [vmem:[#allocation2 + $0x58] sm:$0xff] %v417
    %434 = vst [vmem:[#allocation2 + $0x60] sm:$0xff] %v418
    %435 = vst [vmem:[#allocation2 + $0x68] sm:$0xff] %v419
    %436 = vst [vmem:[#allocation2 + $0x70] sm:$0xff] %v420
    %437 = vst [vmem:[#allocation2 + $0x78] sm:$0xff] %v421
    // Predicated region
    $region22: #{tpu_custom_call.1} parent=1 // pred_check
      %p438 = pneg %p19
    $region23: #{tpu_custom_call.1} parent=1 // pred_check_branch
      %440 = sbr.rel (%p438) target = $region25
    $region24: #{tpu_custom_call.1} parent=1 // pred_region
      %v441 = vld [vmem:[%s2] sm:$0xff]
      %v442 = vld [vmem:[%s2 + $0x8] sm:$0xff]
      %v443 = vld [vmem:[%s2 + $0x10] sm:$0xff]
      %v444 = vld [vmem:[%s2 + $0x18] sm:$0xff]
      %v445 = vld [vmem:[%s2 + $0x20] sm:$0xff]
      %v446 = vld [vmem:[%s2 + $0x28] sm:$0xff]
      %v447 = vld [vmem:[%s2 + $0x30] sm:$0xff]
      %v448 = vld [vmem:[%s2 + $0x38] sm:$0xff]
      %v449 = vld [vmem:[%s2 + $0x40] sm:$0xff]
      %v450 = vld [vmem:[%s2 + $0x48] sm:$0xff]
      %v451 = vld [vmem:[%s2 + $0x50] sm:$0xff]
      %v452 = vld [vmem:[%s2 + $0x58] sm:$0xff]
      %v453 = vld [vmem:[%s2 + $0x60] sm:$0xff]
      %v454 = vld [vmem:[%s2 + $0x68] sm:$0xff]
      %v455 = vld [vmem:[%s2 + $0x70] sm:$0xff]
      %v456 = vld [vmem:[%s2 + $0x78] sm:$0xff]
      %v457 = vld [vmem:[#allocation2] sm:$0xff]
      %v458 = vld [vmem:[#allocation2 + $0x8] sm:$0xff]
      %v459 = vld [vmem:[#allocation2 + $0x10] sm:$0xff]
      %v460 = vld [vmem:[#allocation2 + $0x18] sm:$0xff]
      %v461 = vld [vmem:[#allocation2 + $0x20] sm:$0xff]
      %v462 = vld [vmem:[#allocation2 + $0x28] sm:$0xff]
      %v463 = vld [vmem:[#allocation2 + $0x30] sm:$0xff]
      %v464 = vld [vmem:[#allocation2 + $0x38] sm:$0xff]
      %v465 = vld [vmem:[#allocation2 + $0x40] sm:$0xff]
      %v466 = vld [vmem:[#allocation2 + $0x48] sm:$0xff]
      %v467 = vld [vmem:[#allocation2 + $0x50] sm:$0xff]
      %v468 = vld [vmem:[#allocation2 + $0x58] sm:$0xff]
      %v469 = vld [vmem:[#allocation2 + $0x60] sm:$0xff]
      %v470 = vld [vmem:[#allocation2 + $0x68] sm:$0xff]
      %v471 = vld [vmem:[#allocation2 + $0x70] sm:$0xff]
      %v472 = vld [vmem:[#allocation2 + $0x78] sm:$0xff]
      %474 = vset.pattern.permute.xlu0 0
      %475 = vperm.xlu0 %474, %v441
      %v476 = vpop.permute.xlu0 %475
      %479 = vset.pattern.permute.xlu0 0
      %480 = vperm.xlu0 %479, %v442
      %v481 = vpop.permute.xlu0 %480
      %484 = vset.pattern.permute.xlu0 0
      %485 = vperm.xlu0 %484, %v443
      %v486 = vpop.permute.xlu0 %485
      %489 = vset.pattern.permute.xlu0 0
      %490 = vperm.xlu0 %489, %v444
      %v491 = vpop.permute.xlu0 %490
      %494 = vset.pattern.permute.xlu0 0
      %495 = vperm.xlu0 %494, %v445
      %v496 = vpop.permute.xlu0 %495
      %499 = vset.pattern.permute.xlu0 0
      %500 = vperm.xlu0 %499, %v446
      %v501 = vpop.permute.xlu0 %500
      %504 = vset.pattern.permute.xlu0 0
      %505 = vperm.xlu0 %504, %v447
      %v506 = vpop.permute.xlu0 %505
      %509 = vset.pattern.permute.xlu0 0
      %510 = vperm.xlu0 %509, %v448
      %v511 = vpop.permute.xlu0 %510
      %514 = vset.pattern.permute.xlu0 0
      %515 = vperm.xlu0 %514, %v449
      %v516 = vpop.permute.xlu0 %515
      %519 = vset.pattern.permute.xlu0 0
      %520 = vperm.xlu0 %519, %v450
      %v521 = vpop.permute.xlu0 %520
      %524 = vset.pattern.permute.xlu0 0
      %525 = vperm.xlu0 %524, %v451
      %v526 = vpop.permute.xlu0 %525
      %529 = vset.pattern.permute.xlu0 0
      %530 = vperm.xlu0 %529, %v452
      %v531 = vpop.permute.xlu0 %530
      %534 = vset.pattern.permute.xlu0 0
      %535 = vperm.xlu0 %534, %v453
      %v536 = vpop.permute.xlu0 %535
      %539 = vset.pattern.permute.xlu0 0
      %540 = vperm.xlu0 %539, %v454
      %v541 = vpop.permute.xlu0 %540
      %544 = vset.pattern.permute.xlu0 0
      %545 = vperm.xlu0 %544, %v455
      %v546 = vpop.permute.xlu0 %545
      %549 = vset.pattern.permute.xlu0 0
      %550 = vperm.xlu0 %549, %v456
      %v551 = vpop.permute.xlu0 %550
      %v553 = vmul.f32 %v476, %v457
      %v554 = vmul.f32 %v481, %v458
      %v555 = vmul.f32 %v486, %v459
      %v556 = vmul.f32 %v491, %v460
      %v557 = vmul.f32 %v496, %v461
      %v558 = vmul.f32 %v501, %v462
      %v559 = vmul.f32 %v506, %v463
      %v560 = vmul.f32 %v511, %v464
      %v561 = vmul.f32 %v516, %v465
      %v562 = vmul.f32 %v521, %v466
      %v563 = vmul.f32 %v526, %v467
      %v564 = vmul.f32 %v531, %v468
      %v565 = vmul.f32 %v536, %v469
      %v566 = vmul.f32 %v541, %v470
      %v567 = vmul.f32 %v546, %v471
      %v568 = vmul.f32 %v551, %v472
      %v569 = vmax.f32 %v553, 0.0
      %v570 = vmax.f32 %v554, 0.0
      %v571 = vmax.f32 %v555, 0.0
      %v572 = vmax.f32 %v556, 0.0
      %v573 = vmax.f32 %v557, 0.0
      %v574 = vmax.f32 %v558, 0.0
      %v575 = vmax.f32 %v559, 0.0
      %v576 = vmax.f32 %v560, 0.0
      %v577 = vmax.f32 %v561, 0.0
      %v578 = vmax.f32 %v562, 0.0
      %v579 = vmax.f32 %v563, 0.0
      %v580 = vmax.f32 %v564, 0.0
      %v581 = vmax.f32 %v565, 0.0
      %v582 = vmax.f32 %v566, 0.0
      %v583 = vmax.f32 %v567, 0.0
      %v584 = vmax.f32 %v568, 0.0
      %v585 = vpack.c.bf16 %v570, %v569
      %v586 = vpack.c.bf16 %v572, %v571
      %v587 = vpack.c.bf16 %v574, %v573
      %v588 = vpack.c.bf16 %v576, %v575
      %v589 = vpack.c.bf16 %v578, %v577
      %v590 = vpack.c.bf16 %v580, %v579
      %v591 = vpack.c.bf16 %v582, %v581
      %v592 = vpack.c.bf16 %v584, %v583
      %v593 = vld [vmem:[%s3] sm:$0xf]
      %v594 = vld [vmem:[%s3 + $0x4] sm:$0xf]
      %v595 = vld [vmem:[%s3 + $0x8] sm:$0xf]
      %v596 = vld [vmem:[%s3 + $0xc] sm:$0xf]
      %v597 = vld [vmem:[%s3 + $0x10] sm:$0xf]
      %v598 = vld [vmem:[%s3 + $0x14] sm:$0xf]
      %v599 = vld [vmem:[%s3 + $0x18] sm:$0xf]
      %v600 = vld [vmem:[%s3 + $0x1c] sm:$0xf]
      %v601 = vld [vmem:[%s3 + $0x20] sm:$0xf]
      %v602 = vld [vmem:[%s3 + $0x24] sm:$0xf]
      %v603 = vld [vmem:[%s3 + $0x28] sm:$0xf]
      %v604 = vld [vmem:[%s3 + $0x2c] sm:$0xf]
      %v605 = vld [vmem:[%s3 + $0x30] sm:$0xf]
      %v606 = vld [vmem:[%s3 + $0x34] sm:$0xf]
      %v607 = vld [vmem:[%s3 + $0x38] sm:$0xf]
      %v608 = vld [vmem:[%s3 + $0x3c] sm:$0xf]
      %v625 = vunpack.c.l.b16 %v593
      %v626 = vunpack.c.l.b16 %v594
      %v627 = vunpack.c.l.b16 %v595
      %v628 = vunpack.c.l.b16 %v596
      %v629 = vunpack.c.l.b16 %v597
      %v630 = vunpack.c.l.b16 %v598
      %v631 = vunpack.c.l.b16 %v599
      %v632 = vunpack.c.l.b16 %v600
      %v633 = vunpack.c.l.b16 %v601
      %v634 = vunpack.c.l.b16 %v602
      %v635 = vunpack.c.l.b16 %v603
      %v636 = vunpack.c.l.b16 %v604
      %v637 = vunpack.c.l.b16 %v605
      %v638 = vunpack.c.l.b16 %v606
      %v639 = vunpack.c.l.b16 %v607
      %v640 = vunpack.c.l.b16 %v608
      %v641 = vpack.c.b16 %v626, %v625
      %v642 = vpack.c.b16 %v628, %v627
      %v643 = vpack.c.b16 %v630, %v629
      %v644 = vpack.c.b16 %v632, %v631
      %v645 = vpack.c.b16 %v634, %v633
      %v646 = vpack.c.b16 %v636, %v635
      %v647 = vpack.c.b16 %v638, %v637
      %v648 = vpack.c.b16 %v640, %v639
      %657 = vmatprep.subr.bf16.mxu0 0
      %658 = vmatpush1.bf16.msra.mxu0 %v641
      %659 = vmatprep.subr.bf16.mxu0 0
      %660 = vmatpush1.bf16.msra.mxu0 %v642
      %661 = vmatprep.subr.bf16.mxu0 0
      %662 = vmatpush1.bf16.msra.mxu0 %v643
      %663 = vmatprep.subr.bf16.mxu0 0
      %664 = vmatpush1.bf16.msra.mxu0 %v644
      %665 = vmatprep.subr.bf16.mxu0 0
      %666 = vmatpush1.bf16.msra.mxu0 %v645
      %667 = vmatprep.subr.bf16.mxu0 0
      %668 = vmatpush1.bf16.msra.mxu0 %v646
      %669 = vmatprep.subr.bf16.mxu0 0
      %670 = vmatpush1.bf16.msra.mxu0 %v647
      %671 = vmatprep.subr.bf16.mxu0 0
      %672 = vmatpush1.bf16.msra.mxu0 %v648
      %673 = vmatprep.subr.bf16.mxu0 0
      %674 = vmatpush1.bf16.msra.mxu0 0
      %675 = vmatprep.subr.bf16.mxu0 0
      %676 = vmatpush1.bf16.msra.mxu0 0
      %677 = vmatprep.subr.bf16.mxu0 0
      %678 = vmatpush1.bf16.msra.mxu0 0
      %679 = vmatprep.subr.bf16.mxu0 0
      %680 = vmatpush1.bf16.msra.mxu0 0
      %681 = vmatprep.subr.bf16.mxu0 0
      %682 = vmatpush1.bf16.msra.mxu0 0
      %683 = vmatprep.subr.bf16.mxu0 0
      %684 = vmatpush1.bf16.msra.mxu0 0
      %685 = vmatprep.subr.bf16.mxu0 0
      %686 = vmatpush1.bf16.msra.mxu0 0
      %687 = vmatprep.subr.bf16.mxu0 0
      %688 = vmatpush1.bf16.msra.mxu0 0
      %689 = vmatprep.mubr.bf16.mxu0 0
      %690 = vmatmul.mubr.bf16.gmra.mrb[0].mxu0 %v585
      %v691 = vpop.f32.mrb[0].mxu0
      %v692 = vadd.f32 0.0, %v691
      %v693 = vpop.f32.mrb[0].mxu0
      %v694 = vpop.f32.mrb[0].mxu0
      %v695 = vadd.f32 0.0, %v694
      %v696 = vpop.f32.mrb[0].mxu0
      %697 = vmatprep.mubr.bf16.mxu0 0
      %698 = vmatmul.mubr.bf16.gmra.mrb[0].mxu0 %v586
      %v699 = vpop.f32.mrb[0].mxu0
      %v700 = vadd.f32 0.0, %v699
      %v701 = vpop.f32.mrb[0].mxu0
      %v702 = vpop.f32.mrb[0].mxu0
      %v703 = vadd.f32 0.0, %v702
      %v704 = vpop.f32.mrb[0].mxu0
      %705 = vmatprep.mubr.bf16.mxu0 0
      %706 = vmatmul.mubr.bf16.gmra.mrb[0].mxu0 %v587
      %v707 = vpop.f32.mrb[0].mxu0
      %v708 = vadd.f32 0.0, %v707
      %v709 = vpop.f32.mrb[0].mxu0
      %v710 = vpop.f32.mrb[0].mxu0
      %v711 = vadd.f32 0.0, %v710
      %v712 = vpop.f32.mrb[0].mxu0
      %713 = vmatprep.mubr.bf16.mxu0 0
      %714 = vmatmul.mubr.bf16.gmra.mrb[0].mxu0 %v588
      %v715 = vpop.f32.mrb[0].mxu0
      %v716 = vadd.f32 0.0, %v715
      %v717 = vpop.f32.mrb[0].mxu0
      %v718 = vpop.f32.mrb[0].mxu0
      %v719 = vadd.f32 0.0, %v718
      %v720 = vpop.f32.mrb[0].mxu0
      %721 = vmatprep.mubr.bf16.mxu0 0
      %722 = vmatmul.mubr.bf16.gmra.mrb[0].mxu0 %v589
      %v723 = vpop.f32.mrb[0].mxu0
      %v724 = vadd.f32 0.0, %v723
      %v725 = vpop.f32.mrb[0].mxu0
      %v726 = vpop.f32.mrb[0].mxu0
      %v727 = vadd.f32 0.0, %v726
      %v728 = vpop.f32.mrb[0].mxu0
      %729 = vmatprep.mubr.bf16.mxu0 0
      %730 = vmatmul.mubr.bf16.gmra.mrb[0].mxu0 %v590
      %v731 = vpop.f32.mrb[0].mxu0
      %v732 = vadd.f32 0.0, %v731
      %v733 = vpop.f32.mrb[0].mxu0
      %v734 = vpop.f32.mrb[0].mxu0
      %v735 = vadd.f32 0.0, %v734
      %v736 = vpop.f32.mrb[0].mxu0
      %737 = vmatprep.mubr.bf16.mxu0 0
      %738 = vmatmul.mubr.bf16.gmra.mrb[0].mxu0 %v591
      %v739 = vpop.f32.mrb[0].mxu0
      %v740 = vadd.f32 0.0, %v739
      %v741 = vpop.f32.mrb[0].mxu0
      %v742 = vpop.f32.mrb[0].mxu0
      %v743 = vadd.f32 0.0, %v742
      %v744 = vpop.f32.mrb[0].mxu0
      %745 = vmatprep.mubr.bf16.mxu0 0
      %746 = vmatmul.mubr.bf16.gmra.mrb[0].mxu0 %v592
      %v747 = vpop.f32.mrb[0].mxu0
      %v748 = vadd.f32 0.0, %v747
      %v749 = vpop.f32.mrb[0].mxu0
      %v750 = vpop.f32.mrb[0].mxu0
      %v751 = vadd.f32 0.0, %v750
      %v752 = vpop.f32.mrb[0].mxu0
      %753 = vdwg.mxu0
      %754 = vst [vmem:[#allocation3] sm:$0xff] %v692
      %755 = vst [vmem:[#allocation3 + $0x8] sm:$0xff] %v695
      %756 = vst [vmem:[#allocation3 + $0x10] sm:$0xff] %v700
      %757 = vst [vmem:[#allocation3 + $0x18] sm:$0xff] %v703
      %758 = vst [vmem:[#allocation3 + $0x20] sm:$0xff] %v708
      %759 = vst [vmem:[#allocation3 + $0x28] sm:$0xff] %v711
      %760 = vst [vmem:[#allocation3 + $0x30] sm:$0xff] %v716
      %761 = vst [vmem:[#allocation3 + $0x38] sm:$0xff] %v719
      %762 = vst [vmem:[#allocation3 + $0x40] sm:$0xff] %v724
      %763 = vst [vmem:[#allocation3 + $0x48] sm:$0xff] %v727
      %764 = vst [vmem:[#allocation3 + $0x50] sm:$0xff] %v732
      %765 = vst [vmem:[#allocation3 + $0x58] sm:$0xff] %v735
      %766 = vst [vmem:[#allocation3 + $0x60] sm:$0xff] %v740
      %767 = vst [vmem:[#allocation3 + $0x68] sm:$0xff] %v743
      %768 = vst [vmem:[#allocation3 + $0x70] sm:$0xff] %v748
      %769 = vst [vmem:[#allocation3 + $0x78] sm:$0xff] %v751
    $region25: #{tpu_custom_call.1} parent=1 // pred_fallthru
      _
    // Predicated region
    $region26: #{tpu_custom_call.1} parent=1 // pred_check
      _
    $region27: #{tpu_custom_call.1} parent=1 // pred_check_branch
      %771 = sbr.rel (0) target = $region29
    $region28: #{tpu_custom_call.1} parent=1 // pred_region
      %s773 = ssub.s32 2048, 2048
      %774 = vsyncadd [#allocation4], %s773
      %s775 = sshll.u32 [#allocation3], 4
      %s776 = int_to_ptr.vmem [resolvable:$true] %s775
      %781 = dma.vmem_to_hbm [thread:$0]  %s776, 2048, %s4, [#allocation4], 128, 128, 8
    $region29: #{tpu_custom_call.1} parent=1 // pred_fallthru
      _
    // Predicated region
    $region30: #{tpu_custom_call.1} parent=1 // pred_check
      _
    $region31: #{tpu_custom_call.1} parent=1 // pred_check_branch
      %783 = sbr.rel (0) target = $region33
    $region32: #{tpu_custom_call.1} parent=1 // pred_region
      %784 = dma.done [#allocation4], 2048
    $region33: #{tpu_custom_call.1} parent=1 // pred_fallthru
      _
    %785 = vsyncpa [#allocation4], 1

</llo_original>
